<compile_context>
chip_gen: v6e
topology: v6e:2x2x1
jax: 0.10.0
libtpu: 0.0.40
codegen_flags: <defaults>
</compile_context>

<pallas_src>
import jax
import jax.numpy as jnp
from jax.experimental import pallas as pl
from jax.experimental.pallas import tpu as pltpu


def _qk_kernel(x_ref, w_ref, b_ref, o_ref):
    """One fused step: project Q and K with ONE MXU push, then one QK^T push.

    x_ref : (NBh, 2d)      rows with [q | k] concatenated along features
    w_ref : (2d, 2d)       block_diag(wq^T, wk^T)
    b_ref : (1, 2d)        [bq | bk]
    o_ref : (1, NBh, NBh)  full gram of this step's projected rows
    """
    two_d = w_ref.shape[0]
    d = two_d // 2

    # Single MXU push for both projections (block-diagonal weight).
    p = jnp.dot(x_ref[...], w_ref[...], preferred_element_type=jnp.float32)
    p = p + b_ref[...]
    q_proj = p[:, :d]          # within-vreg lane selects (cheap at 2d = 32)
    k_proj = p[:, d:two_d]

    # Single MXU push for the full gram Q @ K^T, contracting dim 1 of both
    # operands (no in-kernel transpose).  The off-(block)-diagonal entries are
    # redundant but free at this size (<1% of the MXU array either way).
    s = jax.lax.dot_general(
        q_proj, k_proj,
        dimension_numbers=(((1,), (1,)), ((), ())),
        preferred_element_type=jnp.float32)

    # One dense slab store instead of per-item masked (h, h) writes.
    o_ref[0] = s


def _two_tensorcores():
    """True only on chips with 2 TensorCores (v7x); v5e/v6e are single-TC."""
    try:
        kind = jax.devices()[0].device_kind.lower()
        return ("v7" in kind) or ("tpu7" in kind)
    except Exception:
        return False


def model_forward(q, k, v, wq, bq, wk, bk, wv, bv, mask=None,
                  dropout=None, scale_factor=1, inv_scale_factor=None):
    """q, k, v: (n_k, b, h, d) float32.  Returns scaled_qk: (n_k, b, h, h)."""
    del v, wv, bv, mask, dropout, scale_factor, inv_scale_factor  # dead paths

    n_k, b, h, d = q.shape
    N = n_k * b

    # G = 2 only on a 2-TensorCore chip (v7x) when the split is tile-legal;
    # on single-TC v5e/v6e a second grid step is pure overhead -> G = 1.
    G = 1
    if _two_tensorcores() and N % 2 == 0 and ((N // 2) * h) % 8 == 0:
        G = 2
    NB = N // G
    NBh = NB * h

    # Wrapper-side prep, done once outside the kernel.
    qf = q.reshape(N * h, d)
    kf = k.reshape(N * h, d)
    x = jnp.concatenate([qf, kf], axis=1)                      # (N*h, 2d)
    zeros = jnp.zeros((d, d), wq.dtype)
    w_bd = jnp.concatenate(
        [jnp.concatenate([wq.T, zeros], axis=1),
         jnp.concatenate([zeros, wk.T], axis=1)], axis=0)      # (2d, 2d)
    b2 = jnp.concatenate([bq, bk]).reshape(1, 2 * d)           # (1, 2d)

    out = pl.pallas_call(
        _qk_kernel,
        out_shape=jax.ShapeDtypeStruct((G, NBh, NBh), jnp.float32),
        grid=(G,),
        in_specs=[
            pl.BlockSpec((NBh, 2 * d), lambda i: (i, 0)),
            pl.BlockSpec((2 * d, 2 * d), lambda i: (0, 0)),
            pl.BlockSpec((1, 2 * d), lambda i: (0, 0)),
        ],
        out_specs=pl.BlockSpec((1, NBh, NBh), lambda i: (i, 0, 0)),
        compiler_params=pltpu.CompilerParams(
            dimension_semantics=("parallel",)),
    )(x, w_bd, b2)

    # Extract the per-item (h, h) diagonal blocks of each step's gram in plain
    # JAX (keeps the kernel's output a single dense slab).
    s5 = out.reshape(G, NB, h, NB, h)
    diag = jnp.diagonal(s5, axis1=1, axis2=3)      # (G, h, h, NB)
    qk = jnp.moveaxis(diag, -1, 1)                 # (G, NB, h, h)
    return qk.reshape(n_k, b, h, h)


if __name__ == "__main__":
    d = 16          # Linear(16, 16)
    n_k, b, h = 2, 2, 8

    key = jax.random.PRNGKey(0)
    keys = jax.random.split(key, 9)

    # Deterministic parameter init (PyTorch Linear-style uniform bound).
    bound = 1.0 / jnp.sqrt(jnp.float32(d))
    wq = jax.random.uniform(keys[0], (d, d), jnp.float32, -bound, bound)
    bq = jax.random.uniform(keys[1], (d,), jnp.float32, -bound, bound)
    wk = jax.random.uniform(keys[2], (d, d), jnp.float32, -bound, bound)
    bk = jax.random.uniform(keys[3], (d,), jnp.float32, -bound, bound)
    wv = jax.random.uniform(keys[4], (d, d), jnp.float32, -bound, bound)
    bv = jax.random.uniform(keys[5], (d,), jnp.float32, -bound, bound)

    q = jax.random.normal(keys[6], (n_k, b, h, d), jnp.float32)
    k = jax.random.normal(keys[7], (n_k, b, h, d), jnp.float32)
    v = jax.random.normal(keys[8], (n_k, b, h, d), jnp.float32)
    mask = None

    out = model_forward(q, k, v, wq, bq, wk, bk, wv, bv, mask,
                        dropout=None, scale_factor=1, inv_scale_factor=None)
    jax.block_until_ready(out)

    # Reference check in plain JAX.
    Qr = q @ wq.T + bq
    Kr = k @ wk.T + bk
    ref = jnp.einsum("nbhd,nbgd->nbhg", Qr, Kr)
    assert jnp.allclose(out, ref, atol=1e-4, rtol=1e-4), "mismatch vs reference"

    print("KERNEL_OK")
</pallas_src>

<mosaic_0001>
module attributes {stable_mosaic.version = 11 : i64} {
  func.func @_qk_kernel(%arg0: i32, %arg1: memref<32x32xf32, #tpu.memory_space<vmem>>, %arg2: memref<32x32xf32, #tpu.memory_space<vmem>>, %arg3: memref<1x32xf32, #tpu.memory_space<vmem>>, %arg4: memref<1x32x32xf32, #tpu.memory_space<vmem>>) attributes {dimension_semantics = [#tpu.dimension_semantics<parallel>], iteration_bounds = array<i64: 1>, scalar_prefetch = 0 : i64, scratch_operands = 0 : i64, tpu.core_type = #tpu.core_type<tc>, window_params = [{transform_indices = @transform_0, window_bounds = array<i64: 32, 32>}, {pipeline_mode = #tpu.pipeline_mode<synchronous>, transform_indices = @transform_1, window_bounds = array<i64: 32, 32>}, {pipeline_mode = #tpu.pipeline_mode<synchronous>, transform_indices = @transform_2, window_bounds = array<i64: 1, 32>}, {transform_indices = @transform_3, window_bounds = array<i64: 1, 32, 32>}]} {
    %c0 = arith.constant 0 : index
    %c0_0 = arith.constant 0 : index
    %0 = vector.load %arg1[%c0, %c0_0] : memref<32x32xf32, #tpu.memory_space<vmem>>, vector<32x32xf32>
    %c0_1 = arith.constant 0 : index
    %c0_2 = arith.constant 0 : index
    %1 = vector.load %arg2[%c0_1, %c0_2] : memref<32x32xf32, #tpu.memory_space<vmem>>, vector<32x32xf32>
    %cst = arith.constant dense<0.000000e+00> : vector<32x32xf32>
    %2 = tpu.matmul %0, %1, %cst {dimension_numbers = #tpu.dot_dimension_numbers<[1], [0], [0], [1], [0, 0, 1, 1], [], []>} : vector<32x32xf32>, vector<32x32xf32>, vector<32x32xf32> -> vector<32x32xf32>
    %c0_3 = arith.constant 0 : index
    %c0_4 = arith.constant 0 : index
    %3 = vector.load %arg3[%c0_3, %c0_4] : memref<1x32xf32, #tpu.memory_space<vmem>>, vector<1x32xf32>
    %4 = vector.broadcast %3 : vector<1x32xf32> to vector<32x32xf32>
    %5 = arith.addf %2, %4 : vector<32x32xf32>
    %6 = vector.extract_strided_slice %5 {offsets = [0, 0], sizes = [32, 16], strides = [1, 1]} : vector<32x32xf32> to vector<32x16xf32>
    %7 = vector.extract_strided_slice %5 {offsets = [0, 16], sizes = [32, 16], strides = [1, 1]} : vector<32x32xf32> to vector<32x16xf32>
    %cst_5 = arith.constant dense<0.000000e+00> : vector<32x32xf32>
    %8 = tpu.matmul %6, %7, %cst_5 {dimension_numbers = #tpu.dot_dimension_numbers<[1], [1], [0], [0], [0, 0, 1, 0], [], []>} : vector<32x16xf32>, vector<32x16xf32>, vector<32x32xf32> -> vector<32x32xf32>
    %c0_6 = arith.constant 0 : index
    %c0_7 = arith.constant 0 : index
    %c0_8 = arith.constant 0 : index
    %9 = vector.load %arg4[%c0_6, %c0_7, %c0_8] : memref<1x32x32xf32, #tpu.memory_space<vmem>>, vector<1x32x32xf32>
    %10 = vector.shape_cast %9 : vector<1x32x32xf32> to vector<32x32xf32>
    %11 = vector.shape_cast %8 : vector<32x32xf32> to vector<1x32x32xf32>
    tpu.vector_store %arg4[%c0_6, %c0_7, %c0_8], %11 {strides = array<i32>} : memref<1x32x32xf32, #tpu.memory_space<vmem>>, vector<1x32x32xf32>,
    return
  }
  func.func @transform_0(%arg0: i32) -> (i32, i32) {
    %c0_i32 = arith.constant 0 : i32
    %c0_i32_0 = arith.constant 0 : i32
    return %arg0, %c0_i32 : i32, i32
  }
  func.func @transform_1(%arg0: i32) -> (i32, i32) {
    %c0_i32 = arith.constant 0 : i32
    %c0_i32_0 = arith.constant 0 : i32
    %c0_i32_1 = arith.constant 0 : i32
    return %c0_i32, %c0_i32_0 : i32, i32
  }
  func.func @transform_2(%arg0: i32) -> (i32, i32) {
    %c0_i32 = arith.constant 0 : i32
    %c0_i32_0 = arith.constant 0 : i32
    %c0_i32_1 = arith.constant 0 : i32
    return %c0_i32, %c0_i32_0 : i32, i32
  }
  func.func @transform_3(%arg0: i32) -> (i32, i32, i32) {
    %c0_i32 = arith.constant 0 : i32
    %c0_i32_0 = arith.constant 0 : i32
    %c0_i32_1 = arith.constant 0 : i32
    return %arg0, %c0_i32, %c0_i32_0 : i32, i32, i32
  }
}

</mosaic_0001>

<llo_original>
// kernel: tpu_custom_call.1
$region0: #{tpu_custom_call.1}
  #allocation0 [shape = 'u32[]', space=smem, size = 0x4, offset = 0x4, fixed_abs, tag = 'smem constant byte address 0x4 - core index']
  #allocation1 [shape = 'u32[144,128]{1,0:T(1,128)}', space=vmem, size = 0x12000, scoped, tag = 'internal scratch']
  %s0 = inlined_call_operand.hbm [shape: f32[32,32], index: 0, kind: input, shape index: {}]
  %s1 = inlined_call_operand.hbm [shape: f32[32,32], index: 1, kind: input, shape index: {}]
  %s2 = inlined_call_operand.vmem [shape: f32[1,32], index: 2, kind: input, shape index: {}]
  %s3 = inlined_call_operand.hbm [shape: f32[1,32,32], index: 3, kind: output, shape index: {}]
  %s4 = sld [smem:[#allocation0]]
  $region30: #{tpu_custom_call.1} parent=0
    _
  %s6 = ssub.s32 1, %s4
  %s7 = scalar_select 0, %s6, %s4
  $region1: #{tpu_custom_call.1} parent=0
    #allocation2 [shape = 'u8[16384]{0}', space=vmem, size = 0x4000, scoped, tag = 'input window, operand 0, single buffered']
    #allocation3 [shape = 's32[1]{0}', space=sflag, size = 0x4, scoped, tag = 'scoped memory for tpu_custom_call.1']
    #allocation4 [shape = 's32[1]{0}', space=sflag, size = 0x4, scoped, tag = 'scoped memory for tpu_custom_call.1']
    #allocation5 [shape = 'u8[16384]{0}', space=vmem, size = 0x4000, scoped, tag = 'input window, operand 1, single buffered']
    #allocation6 [shape = 's32[1]{0}', space=sflag, size = 0x4, scoped, tag = 'scoped memory for tpu_custom_call.1']
    #allocation7 [shape = 'u8[16384]{0}', space=vmem, size = 0x4000, scoped, tag = 'output window, operand 0, single buffered']
    %8 = vsyncpa [#allocation3], 0
    %9 = vsyncpa [#allocation6], 0
    %10 = vsyncpa [#allocation4], 0
    // Predicated region
    $region2: #{tpu_custom_call.1} parent=1 // pred_check
      _
    $region3: #{tpu_custom_call.1} parent=1 // pred_check_branch
      %12 = sbr.rel (0) target = $region5
    $region4: #{tpu_custom_call.1} parent=1 // pred_region
      %s14 = ssub.s32 512, 512
      %15 = vsyncadd [#allocation3], %s14
      %s16 = sshll.u32 [#allocation2], 4
      %s17 = int_to_ptr.vmem [resolvable:$true] %s16
      %22 = dma.hbm_to_vmem [thread:$0]  %s0, 512, %s17, [#allocation3], 128, 128, 8
    $region5: #{tpu_custom_call.1} parent=1 // pred_fallthru
      _
    // Predicated region
    $region6: #{tpu_custom_call.1} parent=1 // pred_check
      _
    $region7: #{tpu_custom_call.1} parent=1 // pred_check_branch
      %24 = sbr.rel (0) target = $region9
    $region8: #{tpu_custom_call.1} parent=1 // pred_region
      %s26 = ssub.s32 512, 512
      %27 = vsyncadd [#allocation6], %s26
      %s28 = sshll.u32 [#allocation5], 4
      %s29 = int_to_ptr.vmem [resolvable:$true] %s28
      %34 = dma.hbm_to_vmem [thread:$0]  %s1, 512, %s29, [#allocation6], 128, 128, 8
    $region9: #{tpu_custom_call.1} parent=1 // pred_fallthru
      _
    // Predicated region
    $region10: #{tpu_custom_call.1} parent=1 // pred_check
      _
    $region11: #{tpu_custom_call.1} parent=1 // pred_check_branch
      %36 = sbr.rel (0) target = $region13
    $region12: #{tpu_custom_call.1} parent=1 // pred_region
      _
    $region13: #{tpu_custom_call.1} parent=1 // pred_fallthru
      _
    // Predicated region
    $region14: #{tpu_custom_call.1} parent=1 // pred_check
      _
    $region15: #{tpu_custom_call.1} parent=1 // pred_check_branch
      %38 = sbr.rel (0) target = $region17
    $region16: #{tpu_custom_call.1} parent=1 // pred_region
      %39 = dma.done [#allocation3], 512
    $region17: #{tpu_custom_call.1} parent=1 // pred_fallthru
      _
    // Predicated region
    $region18: #{tpu_custom_call.1} parent=1 // pred_check
      _
    $region19: #{tpu_custom_call.1} parent=1 // pred_check_branch
      %41 = sbr.rel (0) target = $region21
    $region20: #{tpu_custom_call.1} parent=1 // pred_region
      %42 = dma.done [#allocation6], 512
    $region21: #{tpu_custom_call.1} parent=1 // pred_fallthru
      _
    %v43 = vld [vmem:[#allocation2] sm:$0xff]
    %v44 = vld [vmem:[#allocation2 + $0x8] sm:$0xff]
    %v45 = vld [vmem:[#allocation2 + $0x10] sm:$0xff]
    %v46 = vld [vmem:[#allocation2 + $0x18] sm:$0xff]
    %v47 = vld [vmem:[#allocation5] sm:$0xff]
    %v48 = vld [vmem:[#allocation5 + $0x8] sm:$0xff]
    %v49 = vld [vmem:[#allocation5 + $0x10] sm:$0xff]
    %v50 = vld [vmem:[#allocation5 + $0x18] sm:$0xff]
    %v51 = vld [vmem:[%s2] sm:$0x1]
    %v53 = vlaneseq
    %v54 = vshrl.u32 %v53, 7
    %v55 = vsub.s32 0, %v54
    %v56 = vrot.slane %v51, %v55
    %vm58 = vcmask 261120
    %v60 = vsel %vm58, %v43, 0
    %v63 = vsel %vm58, %v44, 0
    %v66 = vsel %vm58, %v45, 0
    %v69 = vsel %vm58, %v46, 0
    %71 = vmatprep.subr.mxu0 0.0
    %72 = vmatpush1.msra.mxu0 0.0
    %73 = vmatprep.subr.mxu0 0.0
    %74 = vmatpush1.msra.mxu0 0.0
    %75 = vmatprep.subr.mxu0 0.0
    %76 = vmatpush1.msra.mxu0 0.0
    %77 = vmatprep.subr.mxu0 0.0
    %78 = vmatpush1.msra.mxu0 0.0
    %79 = vmatprep.subr.mxu0 0.0
    %80 = vmatpush1.msra.mxu0 0.0
    %81 = vmatprep.subr.mxu0 0.0
    %82 = vmatpush1.msra.mxu0 0.0
    %83 = vmatprep.subr.mxu0 0.0
    %84 = vmatpush1.msra.mxu0 0.0
    %85 = vmatprep.subr.mxu0 0.0
    %86 = vmatpush1.msra.mxu0 0.0
    %87 = vmatprep.subr.mxu0 0.0
    %88 = vmatpush1.msra.mxu0 0.0
    %89 = vmatprep.subr.mxu0 0.0
    %90 = vmatpush1.msra.mxu0 0.0
    %91 = vmatprep.subr.mxu0 0.0
    %92 = vmatpush1.msra.mxu0 0.0
    %93 = vmatprep.subr.mxu0 0.0
    %94 = vmatpush1.msra.mxu0 0.0
    %95 = vmatprep.subr.mxu0 0.0
    %96 = vmatpush1.msra.mxu0 %v50
    %97 = vmatprep.subr.mxu0 0.0
    %98 = vmatpush1.msra.mxu0 %v49
    %99 = vmatprep.subr.mxu0 0.0
    %100 = vmatpush1.msra.mxu0 %v48
    %101 = vmatprep.subr.mxu0 0.0
    %102 = vmatpush1.msra.mxu0 %v47
    %103 = vmatprep.subr.mxu0 0.0
    %104 = vmatpush2.msra.mxu0 0.0
    %105 = vmatprep.subr.mxu0 0.0
    %106 = vmatpush2.msra.mxu0 0.0
    %107 = vmatprep.subr.mxu0 0.0
    %108 = vmatpush2.msra.mxu0 0.0
    %109 = vmatprep.subr.mxu0 0.0
    %110 = vmatpush2.msra.mxu0 0.0
    %111 = vmatprep.subr.mxu0 0.0
    %112 = vmatpush2.msra.mxu0 0.0
    %113 = vmatprep.subr.mxu0 0.0
    %114 = vmatpush2.msra.mxu0 0.0
    %115 = vmatprep.subr.mxu0 0.0
    %116 = vmatpush2.msra.mxu0 0.0
    %117 = vmatprep.subr.mxu0 0.0
    %118 = vmatpush2.msra.mxu0 0.0
    %119 = vmatprep.subr.mxu0 0.0
    %120 = vmatpush2.msra.mxu0 0.0
    %121 = vmatprep.subr.mxu0 0.0
    %122 = vmatpush2.msra.mxu0 0.0
    %123 = vmatprep.subr.mxu0 0.0
    %124 = vmatpush2.msra.mxu0 0.0
    %125 = vmatprep.subr.mxu0 0.0
    %126 = vmatpush2.msra.mxu0 0.0
    %127 = vmatprep.subr.mxu0 0.0
    %128 = vmatpush2.msra.mxu0 0.0
    %129 = vmatprep.subr.mxu0 0.0
    %130 = vmatpush2.msra.mxu0 0.0
    %131 = vmatprep.subr.mxu0 0.0
    %132 = vmatpush2.msra.mxu0 0.0
    %133 = vmatprep.subr.mxu0 0.0
    %134 = vmatpush2.msra.mxu0 0.0
    %135 = vmatprep.mubr.f32.mxu0 0.0
    %136 = vmatmul.mubr.f32.gmra.mxu0 %v60
    %v137 = vpop.f32.mrf.mxu0
    %v138 = vadd.f32 %v56, %v137
    %v139 = vpop.f32.mrf.mxu0
    %140 = vmatprep.mubr.f32.mxu0 0.0
    %141 = vmatmul.mubr.f32.gmra.mxu0 %v63
    %v142 = vpop.f32.mrf.mxu0
    %v143 = vadd.f32 %v56, %v142
    %v144 = vpop.f32.mrf.mxu0
    %145 = vmatprep.mubr.f32.mxu0 0.0
    %146 = vmatmul.mubr.f32.gmra.mxu0 %v66
    %v147 = vpop.f32.mrf.mxu0
    %v148 = vadd.f32 %v56, %v147
    %v149 = vpop.f32.mrf.mxu0
    %150 = vmatprep.mubr.f32.mxu0 0.0
    %151 = vmatmul.mubr.f32.gmra.mxu0 %v69
    %v152 = vpop.f32.mrf.mxu0
    %v153 = vadd.f32 %v56, %v152
    %v154 = vpop.f32.mrf.mxu0
    %155 = vdwg.mxu0
    %160 = vrot.lane.b32.xlu0 %v138, 112
    %v161 = vpop.permute.xlu0 %160
    %162 = vrot.lane.b32.xlu0 %v143, 112
    %v163 = vpop.permute.xlu0 %162
    %164 = vrot.lane.b32.xlu0 %v148, 112
    %v165 = vpop.permute.xlu0 %164
    %166 = vrot.lane.b32.xlu0 %v153, 112
    %v167 = vpop.permute.xlu0 %166
    %vm168 = vcmask 130048
    %v169 = vsel %vm168, %v138, 0
    %v171 = vsel %vm168, %v143, 0
    %v173 = vsel %vm168, %v148, 0
    %v175 = vsel %vm168, %v153, 0
    %v177 = vsel %vm168, %v161, 0
    %v179 = vsel %vm168, %v163, 0
    %v181 = vsel %vm168, %v165, 0
    %v183 = vsel %vm168, %v167, 0
    %185 = vmatprep.subr.mxu0 0.0
    %186 = vmatpush1.xpose.msra.mxu0 0.0
    %187 = vmatprep.subr.mxu0 0.0
    %188 = vmatpush1.xpose.msra.mxu0 0.0
    %189 = vmatprep.subr.mxu0 0.0
    %190 = vmatpush1.xpose.msra.mxu0 0.0
    %191 = vmatprep.subr.mxu0 0.0
    %192 = vmatpush1.xpose.msra.mxu0 0.0
    %193 = vmatprep.subr.mxu0 0.0
    %194 = vmatpush1.xpose.msra.mxu0 0.0
    %195 = vmatprep.subr.mxu0 0.0
    %196 = vmatpush1.xpose.msra.mxu0 0.0
    %197 = vmatprep.subr.mxu0 0.0
    %198 = vmatpush1.xpose.msra.mxu0 0.0
    %199 = vmatprep.subr.mxu0 0.0
    %200 = vmatpush1.xpose.msra.mxu0 0.0
    %201 = vmatprep.subr.mxu0 0.0
    %202 = vmatpush1.xpose.msra.mxu0 0.0
    %203 = vmatprep.subr.mxu0 0.0
    %204 = vmatpush1.xpose.msra.mxu0 0.0
    %205 = vmatprep.subr.mxu0 0.0
    %206 = vmatpush1.xpose.msra.mxu0 0.0
    %207 = vmatprep.subr.mxu0 0.0
    %208 = vmatpush1.xpose.msra.mxu0 0.0
    %209 = vmatprep.subr.mxu0 0.0
    %210 = vmatpush1.xpose.msra.mxu0 %v183
    %211 = vmatprep.subr.mxu0 0.0
    %212 = vmatpush1.xpose.msra.mxu0 %v181
    %213 = vmatprep.subr.mxu0 0.0
    %214 = vmatpush1.xpose.msra.mxu0 %v179
    %215 = vmatprep.subr.mxu0 0.0
    %216 = vmatpush1.xpose.msra.mxu0 %v177
    %217 = vmatprep.subr.mxu0 0.0
    %218 = vmatpush2.xpose.msra.mxu0 0.0
    %219 = vmatprep.subr.mxu0 0.0
    %220 = vmatpush2.xpose.msra.mxu0 0.0
    %221 = vmatprep.subr.mxu0 0.0
    %222 = vmatpush2.xpose.msra.mxu0 0.0
    %223 = vmatprep.subr.mxu0 0.0
    %224 = vmatpush2.xpose.msra.mxu0 0.0
    %225 = vmatprep.subr.mxu0 0.0
    %226 = vmatpush2.xpose.msra.mxu0 0.0
    %227 = vmatprep.subr.mxu0 0.0
    %228 = vmatpush2.xpose.msra.mxu0 0.0
    %229 = vmatprep.subr.mxu0 0.0
    %230 = vmatpush2.xpose.msra.mxu0 0.0
    %231 = vmatprep.subr.mxu0 0.0
    %232 = vmatpush2.xpose.msra.mxu0 0.0
    %233 = vmatprep.subr.mxu0 0.0
    %234 = vmatpush2.xpose.msra.mxu0 0.0
    %235 = vmatprep.subr.mxu0 0.0
    %236 = vmatpush2.xpose.msra.mxu0 0.0
    %237 = vmatprep.subr.mxu0 0.0
    %238 = vmatpush2.xpose.msra.mxu0 0.0
    %239 = vmatprep.subr.mxu0 0.0
    %240 = vmatpush2.xpose.msra.mxu0 0.0
    %241 = vmatprep.subr.mxu0 0.0
    %242 = vmatpush2.xpose.msra.mxu0 0.0
    %243 = vmatprep.subr.mxu0 0.0
    %244 = vmatpush2.xpose.msra.mxu0 0.0
    %245 = vmatprep.subr.mxu0 0.0
    %246 = vmatpush2.xpose.msra.mxu0 0.0
    %247 = vmatprep.subr.mxu0 0.0
    %248 = vmatpush2.xpose.msra.mxu0 0.0
    %249 = vmatprep.mubr.f32.mxu0 0.0
    %250 = vmatmul.mubr.f32.gmra.mxu0 %v169
    %v251 = vpop.f32.mrf.mxu0
    %v252 = vadd.f32 0.0, %v251
    %v253 = vpop.f32.mrf.mxu0
    %254 = vmatprep.mubr.f32.mxu0 0.0
    %255 = vmatmul.mubr.f32.gmra.mxu0 %v171
    %v256 = vpop.f32.mrf.mxu0
    %v257 = vadd.f32 0.0, %v256
    %v258 = vpop.f32.mrf.mxu0
    %259 = vmatprep.mubr.f32.mxu0 0.0
    %260 = vmatmul.mubr.f32.gmra.mxu0 %v173
    %v261 = vpop.f32.mrf.mxu0
    %v262 = vadd.f32 0.0, %v261
    %v263 = vpop.f32.mrf.mxu0
    %264 = vmatprep.mubr.f32.mxu0 0.0
    %265 = vmatmul.mubr.f32.gmra.mxu0 %v175
    %v266 = vpop.f32.mrf.mxu0
    %v267 = vadd.f32 0.0, %v266
    %v268 = vpop.f32.mrf.mxu0
    %269 = vdwg.mxu0
    %270 = vst.msk [vmem:[#allocation7] sm:$0xff] %vm58, %v252
    %271 = vst.msk [vmem:[#allocation7 + $0x8] sm:$0xff] %vm58, %v257
    %272 = vst.msk [vmem:[#allocation7 + $0x10] sm:$0xff] %vm58, %v262
    %273 = vst.msk [vmem:[#allocation7 + $0x18] sm:$0xff] %vm58, %v267
    // Predicated region
    $region22: #{tpu_custom_call.1} parent=1 // pred_check
      _
    $region23: #{tpu_custom_call.1} parent=1 // pred_check_branch
      %275 = sbr.rel (0) target = $region25
    $region24: #{tpu_custom_call.1} parent=1 // pred_region
      %s277 = ssub.s32 512, 512
      %278 = vsyncadd [#allocation4], %s277
      %s279 = sshll.u32 [#allocation7], 4
      %s280 = int_to_ptr.vmem [resolvable:$true] %s279
      %285 = dma.vmem_to_hbm [thread:$0]  %s280, 512, %s3, [#allocation4], 128, 128, 8
    $region25: #{tpu_custom_call.1} parent=1 // pred_fallthru
      _
    // Predicated region
    $region26: #{tpu_custom_call.1} parent=1 // pred_check
      _
    $region27: #{tpu_custom_call.1} parent=1 // pred_check_branch
      %287 = sbr.rel (0) target = $region29
    $region28: #{tpu_custom_call.1} parent=1 // pred_region
      %288 = dma.done [#allocation4], 512
    $region29: #{tpu_custom_call.1} parent=1 // pred_fallthru
      _
    %289 = vsyncpa [#allocation3], 1
    %290 = vsyncpa [#allocation6], 1
    %291 = vsyncpa [#allocation4], 1

</llo_original>
